<compile_context>
chip_gen: v5e
topology: v5e:2x2
jax: 0.10.0
libtpu: 0.0.40
codegen_flags: <defaults>
</compile_context>

<pallas_src>
import functools

import jax
import jax.numpy as jnp
from jax.experimental import pallas as pl
from jax.experimental.pallas import tpu as pltpu

LANE = 128  # TPU lane width: pad hidden / class dims to this.


def _round_up(x, m):
    return (x + m - 1) // m * m


def _cnet_kernel(z_ref, w1_ref, b1_ref, w2_ref, b2_ref, w3_ref, b3_ref, out_ref):
    # Layer 1: Linear + (Dropout = identity, eval mode) + ReLU
    h1 = jnp.dot(z_ref[...], w1_ref[...], preferred_element_type=jnp.float32)
    h1 = jnp.maximum(h1 + b1_ref[...], 0.0).astype(jnp.bfloat16)

    # Layer 2: Linear + (Dropout = identity, eval mode) + ReLU
    h2 = jnp.dot(h1, w2_ref[...], preferred_element_type=jnp.float32)
    h2 = jnp.maximum(h2 + b2_ref[...], 0.0).astype(jnp.bfloat16)

    # Layer 3: Linear (logits; padded class lanes are zero and sliced off
    # outside the kernel).
    logits = jnp.dot(h2, w3_ref[...], preferred_element_type=jnp.float32)
    out_ref[...] = (logits + b3_ref[...]).astype(out_ref.dtype)


def init_params(key, z_dim, N, n_classes):
    """Deterministic init mimicking PyTorch's default Linear init
    (uniform(-1/sqrt(fan_in), 1/sqrt(fan_in))).  Weights stored as
    (in_features, out_features) so the kernel computes y = x @ W + b."""
    ks = jax.random.split(key, 6)

    def lin(kw, kb, fan_in, fan_out):
        bound = 1.0 / jnp.sqrt(jnp.float32(fan_in))
        w = jax.random.uniform(kw, (fan_in, fan_out), jnp.float32, -bound, bound)
        b = jax.random.uniform(kb, (1, fan_out), jnp.float32, -bound, bound)
        return w, b

    w1, b1 = lin(ks[0], ks[1], z_dim, N)
    w2, b2 = lin(ks[2], ks[3], N, N)
    w3, b3 = lin(ks[4], ks[5], N, n_classes)
    return (w1, b1, w2, b2, w3, b3)


def prepare_params(params):
    """Zero-pad hidden width and class dim to 128 lanes; cast weights to bf16
    (biases stay f32 — they are added to the f32 accumulator)."""
    w1, b1, w2, b2, w3, b3 = params
    z_dim, N = w1.shape
    n_classes = w3.shape[1]
    Np = _round_up(N, LANE)
    Cp = _round_up(n_classes, LANE)

    def pad2(a, rows, cols):
        return jnp.pad(a, ((0, rows - a.shape[0]), (0, cols - a.shape[1])))

    w1p = pad2(w1, z_dim, Np).astype(jnp.bfloat16)
    b1p = pad2(b1, 1, Np)
    w2p = pad2(w2, Np, Np).astype(jnp.bfloat16)
    b2p = pad2(b2, 1, Np)
    w3p = pad2(w3, Np, Cp).astype(jnp.bfloat16)
    b3p = pad2(b3, 1, Cp)
    return (w1p, b1p, w2p, b2p, w3p, b3p), n_classes


@functools.partial(jax.jit, static_argnames=("n_classes",))
def c_net_forward(z, padded_params, n_classes):
    """Fused MLP forward.  z: (B, z_dim) float32.  Returns (B, n_classes) f32."""
    w1, b1, w2, b2, w3, b3 = padded_params
    B, z_dim = z.shape
    Np = w1.shape[1]
    Cp = w3.shape[1]

    # Batch tile: multiple of 16 (bf16 sublane packing), capped at 256 so the
    # per-step working set stays tiny and pipelining kicks in for large B.
    TB = min(256, _round_up(max(B, 16), 16))
    B_pad = _round_up(B, TB)

    zp = jnp.zeros((B_pad, z_dim), jnp.bfloat16).at[:B].set(z.astype(jnp.bfloat16))

    const = lambda i: (0, 0)  # weights/biases: VMEM-resident across the grid
    grid = (pl.cdiv(B_pad, TB),)

    out = pl.pallas_call(
        _cnet_kernel,
        out_shape=jax.ShapeDtypeStruct((B_pad, Cp), jnp.float32),
        grid=grid,
        in_specs=[
            pl.BlockSpec((TB, z_dim), lambda i: (i, 0)),  # z: streamed per tile
            pl.BlockSpec((z_dim, Np), const),             # w1
            pl.BlockSpec((1, Np), const),                 # b1
            pl.BlockSpec((Np, Np), const),                # w2
            pl.BlockSpec((1, Np), const),                 # b2
            pl.BlockSpec((Np, Cp), const),                # w3
            pl.BlockSpec((1, Cp), const),                 # b3
        ],
        out_specs=pl.BlockSpec((TB, Cp), lambda i: (i, 0)),
        compiler_params=pltpu.CompilerParams(
            dimension_semantics=("parallel",),
        ),
    )(zp, w1, b1, w2, b2, w3, b3)

    # Drop batch padding and the zero-padded class lanes.
    return out[:B, :n_classes]


def reference_forward(z, params):
    """Pure-JAX f32 reference for correctness check."""
    w1, b1, w2, b2, w3, b3 = params
    h1 = jnp.maximum(z @ w1 + b1, 0.0)
    h2 = jnp.maximum(h1 @ w2 + b2, 0.0)
    return h2 @ w3 + b3


if __name__ == "__main__":
    # Shapes consistent with C_net(N=64, z_dim=32, n_classes=10, p_drop=0.5).
    B, z_dim, N, n_classes = 2, 32, 64, 10

    key = jax.random.PRNGKey(0)
    k_z, k_p = jax.random.split(key)
    z = jax.random.normal(k_z, (B, z_dim), jnp.float32)
    params = init_params(k_p, z_dim, N, n_classes)
    padded_params, _ = prepare_params(params)

    out = c_net_forward(z, padded_params, n_classes)
    out = jax.block_until_ready(out)

    ref = reference_forward(z, params)
    assert out.shape == (B, n_classes)
    max_err = float(jnp.max(jnp.abs(out - ref)))
    # bf16 weights/activations vs f32 reference -> loose-ish tolerance.
    assert max_err < 5e-2, f"mismatch vs reference: max abs err = {max_err}"

    print("KERNEL_OK")
</pallas_src>

<mosaic_0001>
module attributes {stable_mosaic.version = 11 : i64} {
  func.func @_cnet_kernel(%arg0: i32, %arg1: memref<16x32xbf16, #tpu.memory_space<vmem>>, %arg2: memref<32x128xbf16, #tpu.memory_space<vmem>>, %arg3: memref<1x128xf32, #tpu.memory_space<vmem>>, %arg4: memref<128x128xbf16, #tpu.memory_space<vmem>>, %arg5: memref<1x128xf32, #tpu.memory_space<vmem>>, %arg6: memref<128x128xbf16, #tpu.memory_space<vmem>>, %arg7: memref<1x128xf32, #tpu.memory_space<vmem>>, %arg8: memref<16x128xf32, #tpu.memory_space<vmem>>) attributes {dimension_semantics = [#tpu.dimension_semantics<parallel>], iteration_bounds = array<i64: 1>, scalar_prefetch = 0 : i64, scratch_operands = 0 : i64, tpu.core_type = #tpu.core_type<tc>, window_params = [{transform_indices = @transform_0, window_bounds = array<i64: 16, 32>}, {pipeline_mode = #tpu.pipeline_mode<synchronous>, transform_indices = @transform_1, window_bounds = array<i64: 32, 128>}, {pipeline_mode = #tpu.pipeline_mode<synchronous>, transform_indices = @transform_2, window_bounds = array<i64: 1, 128>}, {pipeline_mode = #tpu.pipeline_mode<synchronous>, transform_indices = @transform_3, window_bounds = array<i64: 128, 128>}, {pipeline_mode = #tpu.pipeline_mode<synchronous>, transform_indices = @transform_4, window_bounds = array<i64: 1, 128>}, {pipeline_mode = #tpu.pipeline_mode<synchronous>, transform_indices = @transform_5, window_bounds = array<i64: 128, 128>}, {pipeline_mode = #tpu.pipeline_mode<synchronous>, transform_indices = @transform_6, window_bounds = array<i64: 1, 128>}, {transform_indices = @transform_7, window_bounds = array<i64: 16, 128>}]} {
    %c0 = arith.constant 0 : index
    %c0_0 = arith.constant 0 : index
    %0 = vector.load %arg1[%c0, %c0_0] : memref<16x32xbf16, #tpu.memory_space<vmem>>, vector<16x32xbf16>
    %c0_1 = arith.constant 0 : index
    %c0_2 = arith.constant 0 : index
    %1 = vector.load %arg2[%c0_1, %c0_2] : memref<32x128xbf16, #tpu.memory_space<vmem>>, vector<32x128xbf16>
    %cst = arith.constant dense<0.000000e+00> : vector<16x128xf32>
    %2 = tpu.matmul %0, %1, %cst {dimension_numbers = #tpu.dot_dimension_numbers<[1], [0], [0], [1], [0, 0, 1, 1], [], []>} : vector<16x32xbf16>, vector<32x128xbf16>, vector<16x128xf32> -> vector<16x128xf32>
    %c0_3 = arith.constant 0 : index
    %c0_4 = arith.constant 0 : index
    %3 = vector.load %arg3[%c0_3, %c0_4] : memref<1x128xf32, #tpu.memory_space<vmem>>, vector<1x128xf32>
    %4 = vector.broadcast %3 : vector<1x128xf32> to vector<16x128xf32>
    %5 = arith.addf %2, %4 : vector<16x128xf32>
    %cst_5 = arith.constant 0.000000e+00 : f32
    %6 = vector.broadcast %cst_5 : f32 to vector<16x128xf32>
    %7 = arith.maximumf %5, %6 : vector<16x128xf32>
    %8 = arith.truncf %7 : vector<16x128xf32> to vector<16x128xbf16>
    %c0_6 = arith.constant 0 : index
    %c0_7 = arith.constant 0 : index
    %9 = vector.load %arg4[%c0_6, %c0_7] : memref<128x128xbf16, #tpu.memory_space<vmem>>, vector<128x128xbf16>
    %cst_8 = arith.constant dense<0.000000e+00> : vector<16x128xf32>
    %10 = tpu.matmul %8, %9, %cst_8 {dimension_numbers = #tpu.dot_dimension_numbers<[1], [0], [0], [1], [0, 0, 1, 1], [], []>} : vector<16x128xbf16>, vector<128x128xbf16>, vector<16x128xf32> -> vector<16x128xf32>
    %c0_9 = arith.constant 0 : index
    %c0_10 = arith.constant 0 : index
    %11 = vector.load %arg5[%c0_9, %c0_10] : memref<1x128xf32, #tpu.memory_space<vmem>>, vector<1x128xf32>
    %12 = vector.broadcast %11 : vector<1x128xf32> to vector<16x128xf32>
    %13 = arith.addf %10, %12 : vector<16x128xf32>
    %cst_11 = arith.constant 0.000000e+00 : f32
    %14 = vector.broadcast %cst_11 : f32 to vector<16x128xf32>
    %15 = arith.maximumf %13, %14 : vector<16x128xf32>
    %16 = arith.truncf %15 : vector<16x128xf32> to vector<16x128xbf16>
    %c0_12 = arith.constant 0 : index
    %c0_13 = arith.constant 0 : index
    %17 = vector.load %arg6[%c0_12, %c0_13] : memref<128x128xbf16, #tpu.memory_space<vmem>>, vector<128x128xbf16>
    %cst_14 = arith.constant dense<0.000000e+00> : vector<16x128xf32>
    %18 = tpu.matmul %16, %17, %cst_14 {dimension_numbers = #tpu.dot_dimension_numbers<[1], [0], [0], [1], [0, 0, 1, 1], [], []>} : vector<16x128xbf16>, vector<128x128xbf16>, vector<16x128xf32> -> vector<16x128xf32>
    %c0_15 = arith.constant 0 : index
    %c0_16 = arith.constant 0 : index
    %19 = vector.load %arg7[%c0_15, %c0_16] : memref<1x128xf32, #tpu.memory_space<vmem>>, vector<1x128xf32>
    %20 = vector.broadcast %19 : vector<1x128xf32> to vector<16x128xf32>
    %21 = arith.addf %18, %20 : vector<16x128xf32>
    %c0_17 = arith.constant 0 : index
    %c0_18 = arith.constant 0 : index
    %22 = vector.load %arg8[%c0_17, %c0_18] : memref<16x128xf32, #tpu.memory_space<vmem>>, vector<16x128xf32>
    tpu.vector_store %arg8[%c0_17, %c0_18], %21 {strides = array<i32>} : memref<16x128xf32, #tpu.memory_space<vmem>>, vector<16x128xf32>,
    return
  }
  func.func @transform_0(%arg0: i32) -> (i32, i32) {
    %c0_i32 = arith.constant 0 : i32
    %c0_i32_0 = arith.constant 0 : i32
    return %arg0, %c0_i32 : i32, i32
  }
  func.func @transform_1(%arg0: i32) -> (i32, i32) {
    %c0_i32 = arith.constant 0 : i32
    %c0_i32_0 = arith.constant 0 : i32
    %c0_i32_1 = arith.constant 0 : i32
    return %c0_i32, %c0_i32_0 : i32, i32
  }
  func.func @transform_2(%arg0: i32) -> (i32, i32) {
    %c0_i32 = arith.constant 0 : i32
    %c0_i32_0 = arith.constant 0 : i32
    %c0_i32_1 = arith.constant 0 : i32
    return %c0_i32, %c0_i32_0 : i32, i32
  }
  func.func @transform_3(%arg0: i32) -> (i32, i32) {
    %c0_i32 = arith.constant 0 : i32
    %c0_i32_0 = arith.constant 0 : i32
    %c0_i32_1 = arith.constant 0 : i32
    return %c0_i32, %c0_i32_0 : i32, i32
  }
  func.func @transform_4(%arg0: i32) -> (i32, i32) {
    %c0_i32 = arith.constant 0 : i32
    %c0_i32_0 = arith.constant 0 : i32
    %c0_i32_1 = arith.constant 0 : i32
    return %c0_i32, %c0_i32_0 : i32, i32
  }
  func.func @transform_5(%arg0: i32) -> (i32, i32) {
    %c0_i32 = arith.constant 0 : i32
    %c0_i32_0 = arith.constant 0 : i32
    %c0_i32_1 = arith.constant 0 : i32
    return %c0_i32, %c0_i32_0 : i32, i32
  }
  func.func @transform_6(%arg0: i32) -> (i32, i32) {
    %c0_i32 = arith.constant 0 : i32
    %c0_i32_0 = arith.constant 0 : i32
    %c0_i32_1 = arith.constant 0 : i32
    return %c0_i32, %c0_i32_0 : i32, i32
  }
  func.func @transform_7(%arg0: i32) -> (i32, i32) {
    %c0_i32 = arith.constant 0 : i32
    %c0_i32_0 = arith.constant 0 : i32
    return %arg0, %c0_i32 : i32, i32
  }
}

</mosaic_0001>

<llo_original>
// kernel: c_net_forward.1
$region0: #{c_net_forward.1}
  #allocation0 [shape = 'u32[]', space=smem, size = 0x4, offset = 0x4, fixed_abs, tag = 'smem constant byte address 0x4 - core index']
  #allocation1 [shape = 'u32[72,128]{1,0:T(1,128)}', space=vmem, size = 0x9000, scoped, tag = 'internal scratch']
  %s0 = inlined_call_operand.vmem [shape: bf16[16,32], index: 0, kind: input, shape index: {}]
  %s1 = inlined_call_operand.hbm [shape: bf16[32,128], index: 1, kind: input, shape index: {}]
  %s2 = inlined_call_operand.vmem [shape: f32[1,128], index: 2, kind: input, shape index: {}]
  %s3 = inlined_call_operand.hbm [shape: bf16[128,128], index: 3, kind: input, shape index: {}]
  %s4 = inlined_call_operand.vmem [shape: f32[1,128], index: 4, kind: input, shape index: {}]
  %s5 = inlined_call_operand.hbm [shape: bf16[128,128], index: 5, kind: input, shape index: {}]
  %s6 = inlined_call_operand.vmem [shape: f32[1,128], index: 6, kind: input, shape index: {}]
  %s7 = inlined_call_operand.vmem [shape: f32[16,128], index: 7, kind: output, shape index: {}]
  %s8 = sld [smem:[#allocation0]]
  $region50: #{c_net_forward.1} parent=0
    _
  %s10 = ssub.s32 1, %s8
  %s11 = scalar_select 0, %s10, %s8
  $region1: #{c_net_forward.1} parent=0
    #allocation2 [shape = 'u8[8192]{0}', space=vmem, size = 0x2000, scoped, tag = 'input window, operand 1, single buffered']
    #allocation3 [shape = 's32[1]{0}', space=sflag, size = 0x4, scoped, tag = 'scoped memory for c_net_forward.1']
    #allocation4 [shape = 'u8[32768]{0}', space=vmem, size = 0x8000, scoped, tag = 'input window, operand 3, single buffered']
    #allocation5 [shape = 's32[1]{0}', space=sflag, size = 0x4, scoped, tag = 'scoped memory for c_net_forward.1']
    #allocation6 [shape = 'u8[32768]{0}', space=vmem, size = 0x8000, scoped, tag = 'input window, operand 5, single buffered']
    %12 = vsyncpa [#allocation3], 0
    %13 = vsyncpa [#allocation5], 0
    // Predicated region
    $region2: #{c_net_forward.1} parent=1 // pred_check
      _
    $region3: #{c_net_forward.1} parent=1 // pred_check_branch
      %15 = sbr.rel (0) target = $region5
    $region4: #{c_net_forward.1} parent=1 // pred_region
      _
    $region5: #{c_net_forward.1} parent=1 // pred_fallthru
      _
    // Predicated region
    $region6: #{c_net_forward.1} parent=1 // pred_check
      _
    $region7: #{c_net_forward.1} parent=1 // pred_check_branch
      %17 = sbr.rel (0) target = $region9
    $region8: #{c_net_forward.1} parent=1 // pred_region
      %19 = vsyncadd [#allocation3], 0
      %s20 = sshll.u32 %s1, 4
      %s21 = int_to_ptr.hbm [resolvable:$true] %s20
      %s22 = sshll.u32 [#allocation2], 4
      %s23 = int_to_ptr.vmem [resolvable:$true] %s22
      %28 = dma.hbm_to_vmem [thread:$0]  %s21, 256, %s23, [#allocation3], 64, 64, 4
    $region9: #{c_net_forward.1} parent=1 // pred_fallthru
      _
    // Predicated region
    $region10: #{c_net_forward.1} parent=1 // pred_check
      _
    $region11: #{c_net_forward.1} parent=1 // pred_check_branch
      %30 = sbr.rel (0) target = $region13
    $region12: #{c_net_forward.1} parent=1 // pred_region
      _
    $region13: #{c_net_forward.1} parent=1 // pred_fallthru
      _
    // Predicated region
    $region14: #{c_net_forward.1} parent=1 // pred_check
      _
    $region15: #{c_net_forward.1} parent=1 // pred_check_branch
      %32 = sbr.rel (0) target = $region17
    $region16: #{c_net_forward.1} parent=1 // pred_region
      %34 = vsyncadd [#allocation5], 0
      %s35 = sshll.u32 %s3, 4
      %s36 = int_to_ptr.hbm [resolvable:$true] %s35
      %s37 = sshll.u32 [#allocation4], 4
      %s38 = int_to_ptr.vmem [resolvable:$true] %s37
      %43 = dma.hbm_to_vmem [thread:$0]  %s36, 1024, %s38, [#allocation5], 64, 64, 4
    $region17: #{c_net_forward.1} parent=1 // pred_fallthru
      _
    // Predicated region
    $region18: #{c_net_forward.1} parent=1 // pred_check
      _
    $region19: #{c_net_forward.1} parent=1 // pred_check_branch
      %45 = sbr.rel (0) target = $region21
    $region20: #{c_net_forward.1} parent=1 // pred_region
      _
    $region21: #{c_net_forward.1} parent=1 // pred_fallthru
      _
    // Predicated region
    $region22: #{c_net_forward.1} parent=1 // pred_check
      _
    $region23: #{c_net_forward.1} parent=1 // pred_check_branch
      %47 = sbr.rel (0) target = $region25
    $region24: #{c_net_forward.1} parent=1 // pred_region
      %49 = vsyncadd [#allocation5], 0
      %s50 = sshll.u32 %s5, 4
      %s51 = int_to_ptr.hbm [resolvable:$true] %s50
      %s52 = sshll.u32 [#allocation6], 4
      %s53 = int_to_ptr.vmem [resolvable:$true] %s52
      %58 = dma.hbm_to_vmem [thread:$0]  %s51, 1024, %s53, [#allocation5], 64, 64, 4
    $region25: #{c_net_forward.1} parent=1 // pred_fallthru
      _
    // Predicated region
    $region26: #{c_net_forward.1} parent=1 // pred_check
      _
    $region27: #{c_net_forward.1} parent=1 // pred_check_branch
      %60 = sbr.rel (0) target = $region29
    $region28: #{c_net_forward.1} parent=1 // pred_region
      _
    $region29: #{c_net_forward.1} parent=1 // pred_fallthru
      _
    // Predicated region
    $region30: #{c_net_forward.1} parent=1 // pred_check
      _
    $region31: #{c_net_forward.1} parent=1 // pred_check_branch
      %62 = sbr.rel (0) target = $region33
    $region32: #{c_net_forward.1} parent=1 // pred_region
      %64 = dma.done [#allocation3], 256
    $region33: #{c_net_forward.1} parent=1 // pred_fallthru
      _
    // Predicated region
    $region34: #{c_net_forward.1} parent=1 // pred_check
      _
    $region35: #{c_net_forward.1} parent=1 // pred_check_branch
      %66 = sbr.rel (0) target = $region37
    $region36: #{c_net_forward.1} parent=1 // pred_region
      %68 = dma.done [#allocation5], 1024
    $region37: #{c_net_forward.1} parent=1 // pred_fallthru
      _
    // Predicated region
    $region38: #{c_net_forward.1} parent=1 // pred_check
      _
    $region39: #{c_net_forward.1} parent=1 // pred_check_branch
      %70 = sbr.rel (0) target = $region41
    $region40: #{c_net_forward.1} parent=1 // pred_region
      %72 = dma.done [#allocation5], 1024
    $region41: #{c_net_forward.1} parent=1 // pred_fallthru
      _
    %v74 = vld [vmem:[%s0] sm:$0xf]
    %v75 = vld [vmem:[%s0 + $0x4] sm:$0xf]
    %v76 = vld [vmem:[#allocation2] sm:$0xf]
    %v77 = vld [vmem:[#allocation2 + $0x4] sm:$0xf]
    %v78 = vld [vmem:[#allocation2 + $0x8] sm:$0xf]
    %v79 = vld [vmem:[#allocation2 + $0xc] sm:$0xf]
    %v80 = vld [vmem:[%s2] sm:$0x1]
    %v82 = vperm.slane %v80, 0
    %v86 = vunpack.c.l.b16 %v74
    %v87 = vunpack.c.l.b16 %v75
    %v88 = vpack.c.b16 %v87, %v86
    %v93 = vunpack.c.l.b16 %v76
    %v94 = vunpack.c.l.b16 %v77
    %v95 = vunpack.c.l.b16 %v78
    %v96 = vunpack.c.l.b16 %v79
    %v97 = vpack.c.b16 %v94, %v93
    %v98 = vpack.c.b16 %v96, %v95
    %vm101 = vcmask 261120
    %v103 = vsel %vm101, %v88, 0
    %105 = vmatpush.bf16.msra.mxu0 0
    %106 = vmatpush.bf16.msra.mxu0 0
    %107 = vmatpush.bf16.msra.mxu0 0
    %108 = vmatpush.bf16.msra.mxu0 0
    %109 = vmatpush.bf16.msra.mxu0 0
    %110 = vmatpush.bf16.msra.mxu0 0
    %111 = vmatpush.bf16.msra.mxu0 %v98
    %112 = vmatpush.bf16.msra.mxu0 %v97
    %113 = vmatmul.bf16.gmra.mxu0 %v103
    %v114 = vpop.f32.mrf.mxu0
    %v115 = vadd.f32 %v82, %v114
    %v116 = vpop.f32.mrf.mxu0
    %v117 = vadd.f32 %v82, %v116
    %118 = vdwg.mxu0
    %v119 = vmax.f32 %v115, 0.0
    %v120 = vmax.f32 %v117, 0.0
    %v121 = vpack.c.bf16 %v120, %v119
    %v122 = vld [vmem:[#allocation4] sm:$0xf]
    %v123 = vld [vmem:[#allocation4 + $0x4] sm:$0xf]
    %v124 = vld [vmem:[#allocation4 + $0x8] sm:$0xf]
    %v125 = vld [vmem:[#allocation4 + $0xc] sm:$0xf]
    %v126 = vld [vmem:[#allocation4 + $0x10] sm:$0xf]
    %v127 = vld [vmem:[#allocation4 + $0x14] sm:$0xf]
    %v128 = vld [vmem:[#allocation4 + $0x18] sm:$0xf]
    %v129 = vld [vmem:[#allocation4 + $0x1c] sm:$0xf]
    %v130 = vld [vmem:[#allocation4 + $0x20] sm:$0xf]
    %v131 = vld [vmem:[#allocation4 + $0x24] sm:$0xf]
    %v132 = vld [vmem:[#allocation4 + $0x28] sm:$0xf]
    %v133 = vld [vmem:[#allocation4 + $0x2c] sm:$0xf]
    %v134 = vld [vmem:[#allocation4 + $0x30] sm:$0xf]
    %v135 = vld [vmem:[#allocation4 + $0x34] sm:$0xf]
    %v136 = vld [vmem:[#allocation4 + $0x38] sm:$0xf]
    %v137 = vld [vmem:[#allocation4 + $0x3c] sm:$0xf]
    %v138 = vld [vmem:[%s4] sm:$0x1]
    %v140 = vperm.slane %v138, 0
    %v158 = vunpack.c.l.b16 %v122
    %v159 = vunpack.c.l.b16 %v123
    %v160 = vunpack.c.l.b16 %v124
    %v161 = vunpack.c.l.b16 %v125
    %v162 = vunpack.c.l.b16 %v126
    %v163 = vunpack.c.l.b16 %v127
    %v164 = vunpack.c.l.b16 %v128
    %v165 = vunpack.c.l.b16 %v129
    %v166 = vunpack.c.l.b16 %v130
    %v167 = vunpack.c.l.b16 %v131
    %v168 = vunpack.c.l.b16 %v132
    %v169 = vunpack.c.l.b16 %v133
    %v170 = vunpack.c.l.b16 %v134
    %v171 = vunpack.c.l.b16 %v135
    %v172 = vunpack.c.l.b16 %v136
    %v173 = vunpack.c.l.b16 %v137
    %v174 = vpack.c.b16 %v159, %v158
    %v175 = vpack.c.b16 %v161, %v160
    %v176 = vpack.c.b16 %v163, %v162
    %v177 = vpack.c.b16 %v165, %v164
    %v178 = vpack.c.b16 %v167, %v166
    %v179 = vpack.c.b16 %v169, %v168
    %v180 = vpack.c.b16 %v171, %v170
    %v181 = vpack.c.b16 %v173, %v172
    %190 = vmatpush.bf16.msra.mxu0 %v181
    %191 = vmatpush.bf16.msra.mxu0 %v180
    %192 = vmatpush.bf16.msra.mxu0 %v179
    %193 = vmatpush.bf16.msra.mxu0 %v178
    %194 = vmatpush.bf16.msra.mxu0 %v177
    %195 = vmatpush.bf16.msra.mxu0 %v176
    %196 = vmatpush.bf16.msra.mxu0 %v175
    %197 = vmatpush.bf16.msra.mxu0 %v174
    %198 = vmatmul.bf16.gmra.mxu0 %v121
    %v199 = vpop.f32.mrf.mxu0
    %v200 = vadd.f32 %v140, %v199
    %v201 = vpop.f32.mrf.mxu0
    %v202 = vadd.f32 %v140, %v201
    %203 = vdwg.mxu0
    %v204 = vmax.f32 %v200, 0.0
    %v205 = vmax.f32 %v202, 0.0
    %v206 = vpack.c.bf16 %v205, %v204
    %v207 = vld [vmem:[#allocation6] sm:$0xf]
    %v208 = vld [vmem:[#allocation6 + $0x4] sm:$0xf]
    %v209 = vld [vmem:[#allocation6 + $0x8] sm:$0xf]
    %v210 = vld [vmem:[#allocation6 + $0xc] sm:$0xf]
    %v211 = vld [vmem:[#allocation6 + $0x10] sm:$0xf]
    %v212 = vld [vmem:[#allocation6 + $0x14] sm:$0xf]
    %v213 = vld [vmem:[#allocation6 + $0x18] sm:$0xf]
    %v214 = vld [vmem:[#allocation6 + $0x1c] sm:$0xf]
    %v215 = vld [vmem:[#allocation6 + $0x20] sm:$0xf]
    %v216 = vld [vmem:[#allocation6 + $0x24] sm:$0xf]
    %v217 = vld [vmem:[#allocation6 + $0x28] sm:$0xf]
    %v218 = vld [vmem:[#allocation6 + $0x2c] sm:$0xf]
    %v219 = vld [vmem:[#allocation6 + $0x30] sm:$0xf]
    %v220 = vld [vmem:[#allocation6 + $0x34] sm:$0xf]
    %v221 = vld [vmem:[#allocation6 + $0x38] sm:$0xf]
    %v222 = vld [vmem:[#allocation6 + $0x3c] sm:$0xf]
    %v223 = vld [vmem:[%s6] sm:$0x1]
    %v225 = vperm.slane %v223, 0
    %v243 = vunpack.c.l.b16 %v207
    %v244 = vunpack.c.l.b16 %v208
    %v245 = vunpack.c.l.b16 %v209
    %v246 = vunpack.c.l.b16 %v210
    %v247 = vunpack.c.l.b16 %v211
    %v248 = vunpack.c.l.b16 %v212
    %v249 = vunpack.c.l.b16 %v213
    %v250 = vunpack.c.l.b16 %v214
    %v251 = vunpack.c.l.b16 %v215
    %v252 = vunpack.c.l.b16 %v216
    %v253 = vunpack.c.l.b16 %v217
    %v254 = vunpack.c.l.b16 %v218
    %v255 = vunpack.c.l.b16 %v219
    %v256 = vunpack.c.l.b16 %v220
    %v257 = vunpack.c.l.b16 %v221
    %v258 = vunpack.c.l.b16 %v222
    %v259 = vpack.c.b16 %v244, %v243
    %v260 = vpack.c.b16 %v246, %v245
    %v261 = vpack.c.b16 %v248, %v247
    %v262 = vpack.c.b16 %v250, %v249
    %v263 = vpack.c.b16 %v252, %v251
    %v264 = vpack.c.b16 %v254, %v253
    %v265 = vpack.c.b16 %v256, %v255
    %v266 = vpack.c.b16 %v258, %v257
    %275 = vmatpush.bf16.msra.mxu0 %v266
    %276 = vmatpush.bf16.msra.mxu0 %v265
    %277 = vmatpush.bf16.msra.mxu0 %v264
    %278 = vmatpush.bf16.msra.mxu0 %v263
    %279 = vmatpush.bf16.msra.mxu0 %v262
    %280 = vmatpush.bf16.msra.mxu0 %v261
    %281 = vmatpush.bf16.msra.mxu0 %v260
    %282 = vmatpush.bf16.msra.mxu0 %v259
    %283 = vmatmul.bf16.gmra.mxu0 %v206
    %v284 = vpop.f32.mrf.mxu0
    %v285 = vadd.f32 %v225, %v284
    %v286 = vpop.f32.mrf.mxu0
    %v287 = vadd.f32 %v225, %v286
    %288 = vdwg.mxu0
    %289 = vst [vmem:[%s7] sm:$0xff] %v285
    %290 = vst [vmem:[%s7 + $0x8] sm:$0xff] %v287
    // Predicated region
    $region42: #{c_net_forward.1} parent=1 // pred_check
      _
    $region43: #{c_net_forward.1} parent=1 // pred_check_branch
      %292 = sbr.rel (0) target = $region45
    $region44: #{c_net_forward.1} parent=1 // pred_region
      _
    $region45: #{c_net_forward.1} parent=1 // pred_fallthru
      _
    // Predicated region
    $region46: #{c_net_forward.1} parent=1 // pred_check
      _
    $region47: #{c_net_forward.1} parent=1 // pred_check_branch
      %294 = sbr.rel (0) target = $region49
    $region48: #{c_net_forward.1} parent=1 // pred_region
      _
    $region49: #{c_net_forward.1} parent=1 // pred_fallthru
      _
    %295 = vsyncpa [#allocation3], 1
    %296 = vsyncpa [#allocation5], 1

</llo_original>
